<compile_context>
chip_gen: v7x
topology: tpu7x:2x2x1
jax: 0.10.0
libtpu: 0.0.40
codegen_flags: <defaults>
</compile_context>

<pallas_src>
import functools

import jax
import jax.numpy as jnp
from jax.experimental import pallas as pl
from jax.experimental.pallas import tpu as pltpu


# ---------------------------------------------------------------------------
# VMEM budgeting (generation-aware).
# ---------------------------------------------------------------------------
def _vmem_limit_and_block_budget():
    cap = None
    try:
        info = pltpu.get_tpu_info()
        cap = int(getattr(info, "vmem_capacity_bytes", 0)) or None
    except Exception:
        cap = None
    if cap is None:
        cap = 64 * 1024 * 1024          # conservative (v7x-sized) fallback
    vmem_limit = int(cap * 0.70)        # leave headroom below physical VMEM
    # Input + output blocks are each double-buffered (~4x block) + f32
    # in-register temporaries + slack.
    block_budget = max(1 << 20, vmem_limit // 8)
    return vmem_limit, block_budget


def _largest_divisor_leq(n, cap):
    cap = max(1, min(int(n), int(cap)))
    for d in range(cap, 0, -1):
        if n % d == 0:
            return d
    return 1


def _sublane_align(dtype):
    return {4: 8, 2: 16, 1: 32}.get(jnp.dtype(dtype).itemsize, 8)


def _choose_channel_tile(n, c, hw, itemsize, budget, align):
    """Largest channel tile TC (divisor of C, sublane-aligned or == C) whose
    (N, TC, HW) slab fits the block budget. None -> slab too big (use 2-pass)."""
    cands = {c}
    if c % align == 0:
        d = align
        while d <= c:
            if c % d == 0:
                cands.add(d)
            d += align
    for tc in sorted(cands, reverse=True):
        if n * tc * hw * itemsize <= budget:
            return tc
    return None


def _choose_stream_tiles(n, c, hw, itemsize, budget):
    """(TN, THW) for the streaming kernels: lane-dense, multi-MiB blocks."""
    row_bytes = c * hw * itemsize
    if row_bytes <= budget:
        return _largest_divisor_leq(n, budget // row_bytes), hw
    # One sample's channel slab already exceeds the budget: tile HW in
    # multiples of 128 that divide HW (fall back to full HW otherwise).
    thw = hw
    m = hw // 128
    while m > 0:
        cand = m * 128
        if hw % cand == 0 and c * cand * itemsize <= budget:
            thw = cand
            break
        m -= 1
    return 1, thw


def _compiler_params(semantics, vmem_limit):
    return pltpu.CompilerParams(dimension_semantics=semantics,
                                vmem_limit_bytes=vmem_limit)


# ---------------------------------------------------------------------------
# Fused training kernel: grid over channel tiles ("parallel").
# The (N, TC, HW) slab is VMEM-resident, so mean, running-mean update,
# quantize and the broadcast add all happen on a single HBM read of x.
# ---------------------------------------------------------------------------
def _fused_train_kernel(x_ref, shift_ref, rm_ref, o_ref, rm_new_ref, *,
                        inv_count, momentum, inv_delta, delta, maxv):
    xb = x_ref[...].astype(jnp.float32)                      # (N, TC, HW)
    partial = jnp.sum(xb, axis=0)                            # (TC, HW)  VALU
    mu = jnp.sum(partial, axis=-1, keepdims=True) * inv_count  # (TC, 1) one XLU reduce
    rm_new_ref[...] = momentum * rm_ref[...] + (1.0 - momentum) * mu
    q = jnp.clip(jnp.floor((shift_ref[...] - mu) * inv_delta + 0.5) * delta,
                 -maxv, maxv)                                 # (TC, 1)
    # Second read of the resident VMEM block (cheap); add in f32, store native.
    o_ref[...] = (x_ref[...].astype(jnp.float32) + q[None, :, :]).astype(o_ref.dtype)


def _fused_train(x3d, shift2d, rm2d, *, tc, momentum, delta, maxv, vmem_limit):
    n, c, hw = x3d.shape
    kern = functools.partial(
        _fused_train_kernel,
        inv_count=1.0 / float(n * hw),
        momentum=float(momentum),
        inv_delta=1.0 / float(delta),
        delta=float(delta),
        maxv=float(maxv),
    )
    out, rm_new = pl.pallas_call(
        kern,
        out_shape=(
            jax.ShapeDtypeStruct((n, c, hw), x3d.dtype),
            jax.ShapeDtypeStruct((c, 1), jnp.float32),
        ),
        grid=(c // tc,),
        in_specs=[
            pl.BlockSpec((n, tc, hw), lambda ci: (0, ci, 0)),
            pl.BlockSpec((tc, 1), lambda ci: (ci, 0)),
            pl.BlockSpec((tc, 1), lambda ci: (ci, 0)),
        ],
        out_specs=(
            pl.BlockSpec((n, tc, hw), lambda ci: (0, ci, 0)),
            pl.BlockSpec((tc, 1), lambda ci: (ci, 0)),
        ),
        compiler_params=_compiler_params(("parallel",), vmem_limit),
    )(x3d, shift2d, rm2d)
    return out, rm_new


# ---------------------------------------------------------------------------
# Fallback pass 1: per-channel mean + running-mean update over large blocks.
#   grid = (N tiles, HW tiles), sequential reduction into a VMEM accumulator.
# ---------------------------------------------------------------------------
def _mean_kernel(x_ref, rm_ref, mu_ref, rm_new_ref, acc_ref, *,
                 inv_count, momentum):
    i = pl.program_id(0)
    j = pl.program_id(1)

    @pl.when(jnp.logical_and(i == 0, j == 0))
    def _():
        acc_ref[...] = jnp.zeros_like(acc_ref)

    xb = x_ref[...].astype(jnp.float32)                      # (TN, C, THW)
    acc_ref[...] += jnp.sum(jnp.sum(xb, axis=0), axis=-1, keepdims=True)

    @pl.when(jnp.logical_and(i == pl.num_programs(0) - 1,
                             j == pl.num_programs(1) - 1))
    def _():
        mu = acc_ref[...] * inv_count
        mu_ref[...] = mu
        rm_new_ref[...] = momentum * rm_ref[...] + (1.0 - momentum) * mu


def _channel_mean(x3d, rm2d, *, tn, thw, momentum, vmem_limit):
    n, c, hw = x3d.shape
    kern = functools.partial(
        _mean_kernel,
        inv_count=1.0 / float(n * hw),
        momentum=float(momentum),
    )
    mu, rm_new = pl.pallas_call(
        kern,
        out_shape=(
            jax.ShapeDtypeStruct((c, 1), jnp.float32),
            jax.ShapeDtypeStruct((c, 1), jnp.float32),
        ),
        grid=(n // tn, hw // thw),
        in_specs=[
            pl.BlockSpec((tn, c, thw), lambda i, j: (i, 0, j)),
            pl.BlockSpec((c, 1), lambda i, j: (0, 0)),
        ],
        out_specs=(
            pl.BlockSpec((c, 1), lambda i, j: (0, 0)),
            pl.BlockSpec((c, 1), lambda i, j: (0, 0)),
        ),
        scratch_shapes=[pltpu.VMEM((c, 1), jnp.float32)],
        compiler_params=_compiler_params(("arbitrary", "arbitrary"), vmem_limit),
    )(x3d, rm2d)
    return mu, rm_new


# ---------------------------------------------------------------------------
# Streaming broadcast add: out = x + q[c]  (q precomputed / hoisted).
#   grid = (N tiles, HW tiles), both "parallel".
# ---------------------------------------------------------------------------
def _shift_add_kernel(x_ref, q_ref, o_ref):
    o_ref[...] = (x_ref[...].astype(jnp.float32)
                  + q_ref[...][None, :, :]).astype(o_ref.dtype)


def _shift_add(x3d, q2d, *, tn, thw, vmem_limit):
    n, c, hw = x3d.shape
    return pl.pallas_call(
        _shift_add_kernel,
        out_shape=jax.ShapeDtypeStruct((n, c, hw), x3d.dtype),
        grid=(n // tn, hw // thw),
        in_specs=[
            pl.BlockSpec((tn, c, thw), lambda i, j: (i, 0, j)),
            pl.BlockSpec((c, 1), lambda i, j: (0, 0)),
        ],
        out_specs=pl.BlockSpec((tn, c, thw), lambda i, j: (i, 0, j)),
        compiler_params=_compiler_params(("parallel", "parallel"), vmem_limit),
    )(x3d, q2d)


# ---------------------------------------------------------------------------
# MeanBatchNorm2d forward (functional): returns (out, new_running_mean).
# ---------------------------------------------------------------------------
def mean_batch_norm2d_forward(x, shift_param, running_mean, *, delta, maxv,
                              momentum=0.9, training=True,
                              track_running_stats=True, fused=None):
    n, c, h, w = x.shape
    hw = h * w
    x3d = x.reshape(n, c, hw)                      # zero-copy NCHW view
    itemsize = jnp.dtype(x.dtype).itemsize
    vmem_limit, block_budget = _vmem_limit_and_block_budget()
    inv_delta = 1.0 / float(delta)

    shift2d = shift_param.reshape(c, 1).astype(jnp.float32)
    rm2d = running_mean.reshape(c, 1).astype(jnp.float32)

    if not training:
        # Eval: quantized shift folded from running_mean (tiny (C,) XLA op,
        # hoisted) + one streaming broadcast add over native-dtype blocks.
        q2d = jnp.clip(
            jnp.floor((shift2d - rm2d) * inv_delta + 0.5) * float(delta),
            -float(maxv), float(maxv))
        tn, thw = _choose_stream_tiles(n, c, hw, itemsize, block_budget)
        out3d = _shift_add(x3d, q2d, tn=tn, thw=thw, vmem_limit=vmem_limit)
        return out3d.reshape(n, c, h, w), running_mean

    align = _sublane_align(x.dtype)
    tc = _choose_channel_tile(n, c, hw, itemsize, block_budget, align)
    if fused is None:
        fused = tc is not None

    if fused and tc is not None:
        out3d, rm_new2d = _fused_train(
            x3d, shift2d, rm2d, tc=tc, momentum=momentum,
            delta=delta, maxv=maxv, vmem_limit=vmem_limit)
    else:
        # Channel slab too large for VMEM: 2-pass (mean + running-mean update,
        # then hoisted quantize in XLA and a streaming broadcast add).
        tn, thw = _choose_stream_tiles(n, c, hw, itemsize, block_budget)
        mu2d, rm_new2d = _channel_mean(
            x3d, rm2d, tn=tn, thw=thw, momentum=momentum, vmem_limit=vmem_limit)
        q2d = jnp.clip(
            jnp.floor((shift2d - mu2d) * inv_delta + 0.5) * float(delta),
            -float(maxv), float(maxv))
        out3d = _shift_add(x3d, q2d, tn=tn, thw=thw, vmem_limit=vmem_limit)

    rm_new = rm_new2d.reshape(c) if track_running_stats else running_mean
    return out3d.reshape(n, c, h, w), rm_new


# ---------------------------------------------------------------------------
# Main: deterministic inputs, run all paths, verify against pure-JAX reference.
# ---------------------------------------------------------------------------
if __name__ == "__main__":
    key = jax.random.PRNGKey(0)
    kx, ks, kr = jax.random.split(key, 3)

    num_features = 4
    delta, maxv, momentum = 0.125, 1.0, 0.9

    N, C, H, W = 2, num_features, 16, 16
    x = jax.random.normal(kx, (N, C, H, W), dtype=jnp.float32)
    shift_param = jax.random.normal(ks, (num_features,), dtype=jnp.float32) * 0.3
    running_mean = jax.random.normal(kr, (num_features,), dtype=jnp.float32) * 0.1

    # Pure-JAX reference mirroring the torch module (training branch).
    mu_ref = x.mean(axis=0).mean(axis=1).mean(axis=1)              # (C,)
    rm_ref = momentum * running_mean + (1.0 - momentum) * mu_ref
    q_ref = jnp.clip(jnp.floor((shift_param - mu_ref) / delta + 0.5) * delta,
                     -maxv, maxv)
    out_ref = x + q_ref.reshape(1, C, 1, 1)

    # ---- training, fused single-pass kernel --------------------------------
    out, rm_new = mean_batch_norm2d_forward(
        x, shift_param, running_mean, delta=delta, maxv=maxv,
        momentum=momentum, training=True, track_running_stats=True)
    out = jax.block_until_ready(out)
    rm_new = jax.block_until_ready(rm_new)
    assert out.shape == out_ref.shape and out.dtype == x.dtype
    assert jnp.allclose(out, out_ref, atol=1e-5, rtol=1e-5), float(
        jnp.max(jnp.abs(out - out_ref)))
    assert jnp.allclose(rm_new, rm_ref, atol=1e-6, rtol=1e-6), float(
        jnp.max(jnp.abs(rm_new - rm_ref)))

    # ---- training, forced 2-pass fallback (coverage of the big-slab path) --
    out2, rm_new2 = mean_batch_norm2d_forward(
        x, shift_param, running_mean, delta=delta, maxv=maxv,
        momentum=momentum, training=True, track_running_stats=True,
        fused=False)
    out2 = jax.block_until_ready(out2)
    assert jnp.allclose(out2, out_ref, atol=1e-5, rtol=1e-5)
    assert jnp.allclose(rm_new2, rm_ref, atol=1e-6, rtol=1e-6)

    # ---- eval path (shift folded from running_mean, buffer untouched) ------
    out_eval, rm_same = mean_batch_norm2d_forward(
        x, shift_param, running_mean, delta=delta, maxv=maxv,
        momentum=momentum, training=False)
    out_eval = jax.block_until_ready(out_eval)
    q_eval = jnp.clip(
        jnp.floor((shift_param - running_mean) / delta + 0.5) * delta,
        -maxv, maxv)
    ref_eval = x + q_eval.reshape(1, C, 1, 1)
    assert jnp.allclose(out_eval, ref_eval, atol=1e-5, rtol=1e-5)
    assert jnp.allclose(rm_same, running_mean)

    print("KERNEL_OK")
</pallas_src>

<mosaic_0001>
module attributes {stable_mosaic.version = 11 : i64} {
  func.func @_fused_train_kernel(%arg0: i32, %arg1: memref<2x4x256xf32, #tpu.memory_space<vmem>>, %arg2: memref<4x1xf32, #tpu.memory_space<vmem>>, %arg3: memref<4x1xf32, #tpu.memory_space<vmem>>, %arg4: memref<2x4x256xf32, #tpu.memory_space<vmem>>, %arg5: memref<4x1xf32, #tpu.memory_space<vmem>>) attributes {dimension_semantics = [#tpu.dimension_semantics<parallel>], iteration_bounds = array<i64: 1>, scalar_prefetch = 0 : i64, scratch_operands = 0 : i64, tpu.core_type = #tpu.core_type<tc>, window_params = [{transform_indices = @transform_0, window_bounds = array<i64: 2, 4, 256>}, {transform_indices = @transform_1, window_bounds = array<i64: 4, 1>}, {transform_indices = @transform_2, window_bounds = array<i64: 4, 1>}, {transform_indices = @transform_3, window_bounds = array<i64: 2, 4, 256>}, {transform_indices = @transform_4, window_bounds = array<i64: 4, 1>}]} {
    %c0 = arith.constant 0 : index
    %c0_0 = arith.constant 0 : index
    %c0_1 = arith.constant 0 : index
    %0 = vector.load %arg1[%c0, %c0_0, %c0_1] : memref<2x4x256xf32, #tpu.memory_space<vmem>>, vector<2x4x256xf32>
    %cst = arith.constant dense<0.000000e+00> : vector<4x256xf32>
    %1 = vector.multi_reduction <add>, %0, %cst [0] : vector<2x4x256xf32> to vector<4x256xf32>
    %cst_2 = arith.constant dense<0.000000e+00> : vector<4xf32>
    %2 = vector.multi_reduction <add>, %1, %cst_2 [1] : vector<4x256xf32> to vector<4xf32>
    %3 = vector.shape_cast %2 : vector<4xf32> to vector<4x1xf32>
    %cst_3 = arith.constant 0.001953125 : f32
    %4 = vector.broadcast %cst_3 : f32 to vector<4x1xf32>
    %5 = arith.mulf %3, %4 : vector<4x1xf32>
    %c0_4 = arith.constant 0 : index
    %c0_5 = arith.constant 0 : index
    %6 = vector.load %arg3[%c0_4, %c0_5] : memref<4x1xf32, #tpu.memory_space<vmem>>, vector<4x1xf32>
    %cst_6 = arith.constant 0.899999976 : f32
    %7 = vector.broadcast %cst_6 : f32 to vector<4x1xf32>
    %8 = arith.mulf %7, %6 : vector<4x1xf32>
    %cst_7 = arith.constant 1.000000e-01 : f32
    %9 = vector.broadcast %cst_7 : f32 to vector<4x1xf32>
    %10 = arith.mulf %9, %5 : vector<4x1xf32>
    %11 = arith.addf %8, %10 : vector<4x1xf32>
    %c0_8 = arith.constant 0 : index
    %c0_9 = arith.constant 0 : index
    %12 = vector.load %arg5[%c0_8, %c0_9] : memref<4x1xf32, #tpu.memory_space<vmem>>, vector<4x1xf32>
    tpu.vector_store %arg5[%c0_8, %c0_9], %11 {strides = array<i32>} : memref<4x1xf32, #tpu.memory_space<vmem>>, vector<4x1xf32>,
    %c0_10 = arith.constant 0 : index
    %c0_11 = arith.constant 0 : index
    %13 = vector.load %arg2[%c0_10, %c0_11] : memref<4x1xf32, #tpu.memory_space<vmem>>, vector<4x1xf32>
    %14 = arith.subf %13, %5 : vector<4x1xf32>
    %cst_12 = arith.constant 8.000000e+00 : f32
    %15 = vector.broadcast %cst_12 : f32 to vector<4x1xf32>
    %16 = arith.mulf %14, %15 : vector<4x1xf32>
    %cst_13 = arith.constant 5.000000e-01 : f32
    %17 = vector.broadcast %cst_13 : f32 to vector<4x1xf32>
    %18 = arith.addf %16, %17 : vector<4x1xf32>
    %19 = math.floor %18 : vector<4x1xf32>
    %cst_14 = arith.constant 1.250000e-01 : f32
    %20 = vector.broadcast %cst_14 : f32 to vector<4x1xf32>
    %21 = arith.mulf %19, %20 : vector<4x1xf32>
    %cst_15 = arith.constant -1.000000e+00 : f32
    %cst_16 = arith.constant 1.000000e+00 : f32
    %22 = vector.broadcast %cst_15 : f32 to vector<4x1xf32>
    %23 = arith.maximumf %22, %21 : vector<4x1xf32>
    %24 = vector.broadcast %cst_16 : f32 to vector<4x1xf32>
    %25 = arith.minimumf %24, %23 : vector<4x1xf32>
    %c0_17 = arith.constant 0 : index
    %c0_18 = arith.constant 0 : index
    %c0_19 = arith.constant 0 : index
    %26 = vector.load %arg1[%c0_17, %c0_18, %c0_19] : memref<2x4x256xf32, #tpu.memory_space<vmem>>, vector<2x4x256xf32>
    %27 = vector.shape_cast %25 : vector<4x1xf32> to vector<1x4x1xf32>
    %28 = vector.broadcast %27 : vector<1x4x1xf32> to vector<2x4x256xf32>
    %29 = arith.addf %26, %28 : vector<2x4x256xf32>
    %c0_20 = arith.constant 0 : index
    %c0_21 = arith.constant 0 : index
    %c0_22 = arith.constant 0 : index
    %30 = vector.load %arg4[%c0_20, %c0_21, %c0_22] : memref<2x4x256xf32, #tpu.memory_space<vmem>>, vector<2x4x256xf32>
    tpu.vector_store %arg4[%c0_20, %c0_21, %c0_22], %29 {strides = array<i32>} : memref<2x4x256xf32, #tpu.memory_space<vmem>>, vector<2x4x256xf32>,
    return
  }
  func.func @transform_0(%arg0: i32) -> (i32, i32, i32) {
    %c0_i32 = arith.constant 0 : i32
    %c0_i32_0 = arith.constant 0 : i32
    %c0_i32_1 = arith.constant 0 : i32
    return %c0_i32, %arg0, %c0_i32_0 : i32, i32, i32
  }
  func.func @transform_1(%arg0: i32) -> (i32, i32) {
    %c0_i32 = arith.constant 0 : i32
    %c0_i32_0 = arith.constant 0 : i32
    return %arg0, %c0_i32 : i32, i32
  }
  func.func @transform_2(%arg0: i32) -> (i32, i32) {
    %c0_i32 = arith.constant 0 : i32
    %c0_i32_0 = arith.constant 0 : i32
    return %arg0, %c0_i32 : i32, i32
  }
  func.func @transform_3(%arg0: i32) -> (i32, i32, i32) {
    %c0_i32 = arith.constant 0 : i32
    %c0_i32_0 = arith.constant 0 : i32
    %c0_i32_1 = arith.constant 0 : i32
    return %c0_i32, %arg0, %c0_i32_0 : i32, i32, i32
  }
  func.func @transform_4(%arg0: i32) -> (i32, i32) {
    %c0_i32 = arith.constant 0 : i32
    %c0_i32_0 = arith.constant 0 : i32
    return %arg0, %c0_i32 : i32, i32
  }
}

</mosaic_0001>

<llo_original>
// kernel: tpu_custom_call.1
$region0: #{tpu_custom_call.1}
  #allocation0 [shape = 'u32[]', space=smem, size = 0x4, offset = 0x4, fixed_abs, tag = 'smem constant byte address 0x4 - core index']
  #allocation1 [shape = 'u32[144,128]{1,0:T(1,128)}', space=vmem, size = 0x12000, scoped, tag = 'internal scratch']
  %s0 = inlined_call_operand.hbm [shape: f32[2,4,256], index: 0, kind: input, shape index: {}]
  %s1 = inlined_call_operand.vmem [shape: f32[4,1], index: 1, kind: input, shape index: {}]
  %s2 = inlined_call_operand.vmem [shape: f32[4,1], index: 2, kind: input, shape index: {}]
  %s3 = inlined_call_operand.hbm [shape: f32[2,4,256], index: 3, kind: output, shape index: {0}]
  %s4 = inlined_call_operand.vmem [shape: f32[4,1], index: 4, kind: output, shape index: {1}]
  %5 = xla_tuple %s3, %s4
  %s6 = sld [smem:[#allocation0]]
  $region34: #{tpu_custom_call.1} parent=0
    _
  %s8 = ssub.s32 1, %s6
  %s9 = scalar_select 0, %s8, %s6
  $region1: #{tpu_custom_call.1} parent=0
    #allocation2 [shape = 'u8[8192]{0}', space=vmem, size = 0x2000, scoped, tag = 'input window, operand 0, single buffered']
    #allocation3 [shape = 's32[1]{0}', space=sflag, size = 0x4, scoped, tag = 'scoped memory for tpu_custom_call.1']
    #allocation4 [shape = 's32[1]{0}', space=sflag, size = 0x4, scoped, tag = 'scoped memory for tpu_custom_call.1']
    #allocation5 [shape = 'u8[8192]{0}', space=vmem, size = 0x2000, scoped, tag = 'output window, operand 0, single buffered']
    %10 = vsyncpa [#allocation3], 0
    %11 = vsyncpa [#allocation4], 0
    // Predicated region
    $region2: #{tpu_custom_call.1} parent=1 // pred_check
      _
    $region3: #{tpu_custom_call.1} parent=1 // pred_check_branch
      %13 = sbr.rel (0) target = $region5
    $region4: #{tpu_custom_call.1} parent=1 // pred_region
      %s15 = ssub.s32 256, 256
      %16 = vsyncadd [#allocation3], %s15
      %s17 = sshll.u32 [#allocation2], 4
      %s18 = int_to_ptr.vmem [resolvable:$true] %s17
      %23 = dma.hbm_to_vmem [thread:$0]  %s0, 256, %s18, [#allocation3], 128, 128, 8
    $region5: #{tpu_custom_call.1} parent=1 // pred_fallthru
      _
    // Predicated region
    $region6: #{tpu_custom_call.1} parent=1 // pred_check
      _
    $region7: #{tpu_custom_call.1} parent=1 // pred_check_branch
      %25 = sbr.rel (0) target = $region9
    $region8: #{tpu_custom_call.1} parent=1 // pred_region
      _
    $region9: #{tpu_custom_call.1} parent=1 // pred_fallthru
      _
    // Predicated region
    $region10: #{tpu_custom_call.1} parent=1 // pred_check
      _
    $region11: #{tpu_custom_call.1} parent=1 // pred_check_branch
      %27 = sbr.rel (0) target = $region13
    $region12: #{tpu_custom_call.1} parent=1 // pred_region
      _
    $region13: #{tpu_custom_call.1} parent=1 // pred_fallthru
      _
    // Predicated region
    $region14: #{tpu_custom_call.1} parent=1 // pred_check
      _
    $region15: #{tpu_custom_call.1} parent=1 // pred_check_branch
      %29 = sbr.rel (0) target = $region17
    $region16: #{tpu_custom_call.1} parent=1 // pred_region
      %30 = dma.done [#allocation3], 256
    $region17: #{tpu_custom_call.1} parent=1 // pred_fallthru
      _
    %v31 = vld [vmem:[#allocation2] sm:$0xff]
    %v32 = vld [vmem:[#allocation2 + $0x8] sm:$0xff]
    %v35 = vcombine.high %v31, %v31
    %v36 = vcombine.high %v32, %v32
    %vm39 = vcmask 1043456
    %v40 = vsel %vm39, %v31, 0.0
    %v41 = vsel %vm39, %v32, 0.0
    %v42 = vadd.f32 %v40, %v41
    %v43 = vsel %vm39, %v35, 0.0
    %v44 = vsel %vm39, %v36, 0.0
    %v45 = vadd.f32 %v43, %v44
    %v46 = vsel %vm39, %v42, 0.0
    %v47 = vsel %vm39, %v45, 0.0
    %v48 = vadd.f32 %v46, %v47
    %49 = vadd.xlane.f32.xlu0 %v48
    %v50 = vpop.xlane.xlu0 %49
    %v51 = vmul.f32 %v50, 0.001953125
    %v52 = vld [vmem:[%s2] sm:$0xf]
    %v53 = vmul.f32 %v52, 0.9
    %v54 = vmul.f32 %v51, 0.1
    %v55 = vadd.f32 %v53, %v54
    %vm56 = vcmask 3072
    %57 = vst.msk [vmem:[%s4] sm:$0xf] %vm56, %v55
    %v58 = vld [vmem:[%s1] sm:$0xf]
    %v59 = vsub.f32 %v58, %v51
    %v60 = vmul.f32 %v59, 8.0
    %v61 = vadd.f32 %v60, 0.5
    %v62 = vfloor.f32 %v61
    %v63 = vmul.f32 %v62, 0.125
    %v64 = vmax.f32 %v63, -1.0
    %v65 = vmin.f32 %v64, 1.0
    %v66 = vld [vmem:[#allocation2] sm:$0xff]
    %v67 = vld [vmem:[#allocation2 + $0x8] sm:$0xff]
    %69 = vset.pattern.permute.xlu0 0
    %70 = vperm.xlu0 %69, %v65
    %v71 = vpop.permute.xlu0 %70
    %v73 = vunpack.c.l.s4 839922192
    %v74 = vunpack.c.0.s8 %v73
    %v75 = vlaneseq
    %v76 = vshrl.u32 %v75, 7
    %v77 = vsub.s32 %v74, %v76
    %v78 = vrot.slane %v71, %v77
    %v80 = vadd.f32 %v66, %v78
    %v81 = vadd.f32 %v67, %v78
    %82 = vst [vmem:[#allocation5] sm:$0xff] %v80
    %83 = vst [vmem:[#allocation5 + $0x8] sm:$0xff] %v81
    // Predicated region
    $region18: #{tpu_custom_call.1} parent=1 // pred_check
      _
    $region19: #{tpu_custom_call.1} parent=1 // pred_check_branch
      %85 = sbr.rel (0) target = $region21
    $region20: #{tpu_custom_call.1} parent=1 // pred_region
      %s87 = ssub.s32 256, 256
      %88 = vsyncadd [#allocation4], %s87
      %s89 = sshll.u32 [#allocation5], 4
      %s90 = int_to_ptr.vmem [resolvable:$true] %s89
      %95 = dma.vmem_to_hbm [thread:$0]  %s90, 256, %s3, [#allocation4], 128, 128, 8
    $region21: #{tpu_custom_call.1} parent=1 // pred_fallthru
      _
    // Predicated region
    $region22: #{tpu_custom_call.1} parent=1 // pred_check
      _
    $region23: #{tpu_custom_call.1} parent=1 // pred_check_branch
      %97 = sbr.rel (0) target = $region25
    $region24: #{tpu_custom_call.1} parent=1 // pred_region
      _
    $region25: #{tpu_custom_call.1} parent=1 // pred_fallthru
      _
    // Predicated region
    $region26: #{tpu_custom_call.1} parent=1 // pred_check
      _
    $region27: #{tpu_custom_call.1} parent=1 // pred_check_branch
      %99 = sbr.rel (0) target = $region29
    $region28: #{tpu_custom_call.1} parent=1 // pred_region
      %100 = dma.done [#allocation4], 256
    $region29: #{tpu_custom_call.1} parent=1 // pred_fallthru
      _
    // Predicated region
    $region30: #{tpu_custom_call.1} parent=1 // pred_check
      _
    $region31: #{tpu_custom_call.1} parent=1 // pred_check_branch
      %102 = sbr.rel (0) target = $region33
    $region32: #{tpu_custom_call.1} parent=1 // pred_region
      _
    $region33: #{tpu_custom_call.1} parent=1 // pred_fallthru
      _
    %103 = vsyncpa [#allocation3], 1
    %104 = vsyncpa [#allocation4], 1

</llo_original>
